<compile_context>
chip_gen: v7x
topology: tpu7x:2x2x1
jax: 0.10.0
libtpu: 0.0.40
codegen_flags: <defaults>
</compile_context>

<pallas_src>
import numpy as np
import jax
import jax.numpy as jnp
from jax.experimental import pallas as pl
from jax.experimental.pallas import tpu as pltpu


def _identity_dma_kernel(x_hbm_ref, o_hbm_ref, sem):
    # One whole-array HBM -> HBM DMA: no VMEM staging, no tiling, no per-step
    # overhead; streams at full HBM bandwidth on every TPU generation.
    copy = pltpu.make_async_copy(x_hbm_ref, o_hbm_ref, sem)
    copy.start()
    copy.wait()


def identity_copy(x):
    """Materialized, bit-exact copy of `x` via a single HBM->HBM DMA."""
    if x.ndim == 0:
        # TODO(synk): 0-d inputs bypass the kernel (identity is exact; nothing to DMA).
        return x

    nbytes = x.size * jnp.dtype(x.dtype).itemsize
    return pl.pallas_call(
        _identity_dma_kernel,
        out_shape=jax.ShapeDtypeStruct(x.shape, x.dtype),
        in_specs=[pl.BlockSpec(memory_space=pl.ANY)],
        out_specs=pl.BlockSpec(memory_space=pl.ANY),
        scratch_shapes=[pltpu.SemaphoreType.DMA],
        compiler_params=pltpu.CompilerParams(has_side_effects=True),
        cost_estimate=pl.CostEstimate(
            flops=0, transcendentals=0, bytes_accessed=2 * nbytes),
    )(x)


def identity_loss_forward(x, y=None, *, materialize=False):
    """Pallas equivalent of identity_loss.forward(x, y) = x (y is ignored).

    Default (materialize=False): return x as-is — zero HBM traffic, no kernel.
    materialize=True: produce a fresh buffer via one HBM->HBM DMA kernel.
    """
    del y  # unused, exactly like the reference module
    if not materialize:
        return x
    return identity_copy(x)


if __name__ == "__main__":
    key = jax.random.PRNGKey(0)
    kx, ky = jax.random.split(key)

    # Small NCHW-style input, plus an arbitrary `y` (ignored by the module).
    x = jax.random.normal(kx, (2, 4, 16, 16), dtype=jnp.float32)
    y = jax.random.normal(ky, (2, 4, 16, 16), dtype=jnp.float32)
    x_host = np.asarray(x)

    # Fast path: identity satisfied with zero HBM traffic (no kernel launch).
    out_fast = jax.block_until_ready(identity_loss_forward(x, y))
    assert out_fast.shape == x_host.shape
    assert out_fast.dtype == x_host.dtype
    assert np.array_equal(np.asarray(out_fast), x_host)

    # Kernel path: materialized copy via a single whole-array HBM->HBM DMA.
    out_copy = jax.block_until_ready(identity_loss_forward(x, y, materialize=True))
    assert out_copy.shape == x_host.shape
    assert out_copy.dtype == x_host.dtype
    assert np.array_equal(np.asarray(out_copy), x_host)

    # Also exercise a lane-ragged / odd shape: the DMA path needs no tiling,
    # no padding, and no VMEM budget regardless of shape.
    x_odd = jax.random.normal(ky, (3, 5, 7), dtype=jnp.float32)
    x_odd_host = np.asarray(x_odd)
    out_odd = jax.block_until_ready(identity_copy(x_odd))
    assert out_odd.shape == x_odd_host.shape
    assert np.array_equal(np.asarray(out_odd), x_odd_host)

    print("KERNEL_OK")
</pallas_src>

<mosaic_0001>
module attributes {stable_mosaic.version = 11 : i64} {
  func.func @_identity_dma_kernel(%arg0: memref<2x4x16x16xf32, #tpu.memory_space<any>>, %arg1: memref<2x4x16x16xf32, #tpu.memory_space<any>>, %arg2: memref<!tpu.dma_semaphore, #tpu.memory_space<semaphore_mem>>) attributes {dimension_semantics = [], scalar_prefetch = 0 : i64, scratch_operands = 1 : i64, tpu.core_type = #tpu.core_type<tc>} {
    tpu.enqueue_dma source(%arg0 : memref<2x4x16x16xf32, #tpu.memory_space<any>>) target(%arg1 : memref<2x4x16x16xf32, #tpu.memory_space<any>>) target_semaphore(%arg2 : memref<!tpu.dma_semaphore, #tpu.memory_space<semaphore_mem>>)
    tpu.wait_dma2 semaphore(%arg2 : memref<!tpu.dma_semaphore, #tpu.memory_space<semaphore_mem>>) src(%arg0 : memref<2x4x16x16xf32, #tpu.memory_space<any>>) dst(%arg1 : memref<2x4x16x16xf32, #tpu.memory_space<any>>)
    return
  }
}

</mosaic_0001>

<llo_original>
// kernel: tpu_custom_call.1
$region0: #{tpu_custom_call.1}
  #allocation0 [shape = 'u32[]', space=smem, size = 0x4, offset = 0x4, fixed_abs, tag = 'smem constant byte address 0x4 - core index']
  #allocation1 [shape = 'u32[144,128]{1,0:T(1,128)}', space=vmem, size = 0x12000, scoped, tag = 'internal scratch']
  #allocation2 [shape = 's32[1]{0}', space=sflag, size = 0x4, scoped, tag = 'scratch operand']
  #allocation3 [shape = 's32[]', space=sflag, size = 0x4, offset = 0, fixed_abs, tag = 'sflag constant byte address 0x0 - dummy sync flag']
  #allocation4 [shape = 'u32[0]{0}', space=smem, size = 0, offset = 0, fixed_abs, tag = 'smem constant byte address 0x0 - null']
  %s0 = inlined_call_operand.hbm [shape: f32[2,4,16,16], index: 0, kind: input, shape index: {}]
  %s1 = inlined_call_operand.hbm [shape: f32[2,4,16,16], index: 1, kind: output, shape index: {}]
  %s2 = sld [smem:[#allocation0]]
  $region2: #{tpu_custom_call.1} parent=0
    _
  %s4 = ssub.s32 1, %s2
  %s5 = scalar_select 0, %s4, %s2
  %s7 = sshll.u32 1, 14
  %s8 = sxor.u32 4294967295, %s7
  %s11 = sshll.u32 3, 24
  %s12 = sxor.u32 4294967295, %s11
  %s13 = sand.u32 0, %s12
  %s15 = sor.u32 %s13, 0
  %18 = dma.general %s0, 2048, %s1, [#allocation2], [#allocation3], [#allocation4], %s15, 0
  %s19 = smul.u32 2, 4
  %s20 = smul.u32 %s19, 16
  %s21 = smul.u32 %s20, 1
  %s22 = sshll.u32 %s21, 4
  %23 = dma.done [#allocation2], %s22
  %24 = vsyncmov [#allocation2]
  %s25 = vpop.sfrf %24
  %p26 = scmp.eq.s32.totalorder %s25, 0
  %p27 = pneg %p26
  %29 = shalt.err (%p27)

</llo_original>
